<compile_context>
chip_gen: v7x
topology: tpu7x:2x2x1
jax: 0.10.0
libtpu: 0.0.40
codegen_flags: <defaults>
</compile_context>

<pallas_src>
import functools

import jax
import jax.numpy as jnp
from jax.experimental import pallas as pl
from jax.experimental.pallas import tpu as pltpu


_VMEM_LIMIT_BYTES = 48 * 1024 * 1024  # explicit; safely below v7x's 64 MiB VMEM


# ------------------------------ tiling helpers --------------------------------


def _largest_divisor_tile(n, multiple, max_tile):
    """Largest tile <= max_tile that is a multiple of `multiple` and divides n.

    Falls back to the full extent n, which is always layout-legal.
    """
    if n <= max_tile:
        return n
    t = (max_tile // multiple) * multiple
    while t >= multiple:
        if n % t == 0:
            return t
        t -= multiple
    return n


def _pick_batch_tile(b, n):
    """For small graphs pack several batch elements per grid step so each step
    carries >= ~128 rows of MXU work (amortizes per-step overhead)."""
    if n >= 128:
        return 1
    bt = min(b, max(1, 128 // n))
    while b % bt:
        bt -= 1
    return bt


# --------------------------------- kernels -------------------------------------


def _graph_conv_kernel(x_ref, adj_ref, w_ref, h_ref, support_ref, *, compute_dtype):
    """One (batch-block, row-tile) step of h = adj @ (x @ W)."""
    row = pl.program_id(1)

    @pl.when(row == 0)
    def _():
        # support = x @ W for the whole batch block; reused across row tiles.
        w = w_ref[...].astype(compute_dtype)                       # (F, H)
        for b in range(x_ref.shape[0]):                            # static Bt
            support_ref[b] = jnp.dot(
                x_ref[b].astype(compute_dtype), w,
                preferred_element_type=jnp.float32,
            ).astype(support_ref.dtype)

    adj = adj_ref[...].astype(compute_dtype)                       # (Bt, TM, N)
    h = jnp.einsum("btn,bnh->bth", adj, support_ref[...],
                   preferred_element_type=jnp.float32)             # (Bt, TM, H)
    h_ref[...] = h.astype(h_ref.dtype)


def _inner_product_relu_kernel(zi_ref, zj_ref, out_ref, *, compute_dtype):
    """out tile (i, j) = relu(z_i @ z_j^T).

    The contraction is on the last axis of BOTH operands (batched dot_general),
    so no transpose of z_j is ever materialized.
    """
    zi = zi_ref[...].astype(compute_dtype)                         # (Bt, TM, D)
    zj = zj_ref[...].astype(compute_dtype)                         # (Bt, TN, D)
    m = jnp.einsum("bid,bjd->bij", zi, zj,
                   preferred_element_type=jnp.float32)             # (Bt, TM, TN)
    out_ref[...] = jnp.maximum(m, 0.0).astype(out_ref.dtype)


# ------------------------------ pallas wrappers --------------------------------


def _graph_conv(x, adj, w, *, batch_tile, row_tile, compute_dtype):
    B, N, F = x.shape
    H = w.shape[1]
    Bt, TM = batch_tile, row_tile
    grid = (B // Bt, N // TM)

    flops = 2 * B * N * F * H + 2 * B * N * N * H
    bytes_accessed = 4 * (x.size + adj.size + w.size + B * N * H)

    return pl.pallas_call(
        functools.partial(_graph_conv_kernel, compute_dtype=compute_dtype),
        out_shape=jax.ShapeDtypeStruct((B, N, H), jnp.float32),
        grid_spec=pltpu.PrefetchScalarGridSpec(
            num_scalar_prefetch=0,
            grid=grid,
            in_specs=[
                # x: resident for the whole batch block (index constant in i).
                pl.BlockSpec((Bt, N, F), lambda bb, i: (bb, 0, 0)),
                # adj: row tile, streamed through the pipeline.
                pl.BlockSpec((Bt, TM, N), lambda bb, i: (bb, i, 0)),
                # W: resident for the whole grid.
                pl.BlockSpec((F, H), lambda bb, i: (0, 0)),
            ],
            out_specs=pl.BlockSpec((Bt, TM, H), lambda bb, i: (bb, i, 0)),
            scratch_shapes=[pltpu.VMEM((Bt, N, H), compute_dtype)],
        ),
        compiler_params=pltpu.CompilerParams(
            dimension_semantics=("parallel", "arbitrary"),
            vmem_limit_bytes=_VMEM_LIMIT_BYTES,
        ),
        cost_estimate=pl.CostEstimate(
            flops=flops, transcendentals=0, bytes_accessed=bytes_accessed),
    )(x, adj, w)


def _inner_product_relu(z, *, batch_tile, row_tile, col_tile, compute_dtype):
    B, N, D = z.shape
    Bt, TM, TN = batch_tile, row_tile, col_tile
    grid = (B // Bt, N // TM, N // TN)

    flops = 2 * B * N * N * D
    bytes_accessed = 4 * (2 * z.size + B * N * N)

    return pl.pallas_call(
        functools.partial(_inner_product_relu_kernel, compute_dtype=compute_dtype),
        out_shape=jax.ShapeDtypeStruct((B, N, N), jnp.float32),
        grid_spec=pltpu.PrefetchScalarGridSpec(
            num_scalar_prefetch=0,
            grid=grid,
            in_specs=[
                pl.BlockSpec((Bt, TM, D), lambda bb, i, j: (bb, i, 0)),
                pl.BlockSpec((Bt, TN, D), lambda bb, i, j: (bb, j, 0)),
            ],
            out_specs=pl.BlockSpec((Bt, TM, TN), lambda bb, i, j: (bb, i, j)),
        ),
        compiler_params=pltpu.CompilerParams(
            dimension_semantics=("parallel", "parallel", "parallel"),
            vmem_limit_bytes=_VMEM_LIMIT_BYTES,
        ),
        cost_estimate=pl.CostEstimate(
            flops=flops, transcendentals=0, bytes_accessed=bytes_accessed),
    )(z, z)


# --------------------------------- forward -------------------------------------


@functools.partial(jax.jit, static_argnames=("fixed", "compute_dtype"))
def gnn_forward(x, adj, w_gc1, *, fixed, compute_dtype=jnp.float32):
    """Pallas GNN forward.

    x:     [B, N, F] float32
    adj:   [B, N, N] float32
    w_gc1: [F, H]    float32   (gc1 weight ~ Normal(mu0, sigma0), no bias)

    compute_dtype: dtype fed to the MXU (accumulation is always f32).
                   jnp.bfloat16 is recommended on v6e / v7x.
    """
    B, N, F = x.shape
    H = w_gc1.shape[1]

    Bt = _pick_batch_tile(B, N)

    # Graph-conv row tile: keep the double-buffered (Bt, TM, N) adj block
    # within ~1/4 of the VMEM budget.
    max_conv_rows = max(8, _VMEM_LIMIT_BYTES // 4 // (2 * 4 * N * Bt))
    tm_conv = _largest_divisor_tile(N, 8, min(512, max_conv_rows))

    # Decoder tiles: row tile a multiple of 8 (sublanes); column tile a
    # multiple of 128 lanes (or full extent) so the (TM, TN) output stores
    # are unmasked / lane-dense.
    tm_dec = _largest_divisor_tile(N, 8, 256)
    tn_dec = _largest_divisor_tile(N, 128, 512)

    h = _graph_conv(x, adj, w_gc1, batch_tile=Bt, row_tile=tm_conv,
                    compute_dtype=compute_dtype)

    dec = functools.partial(_inner_product_relu, batch_tile=Bt,
                            row_tile=tm_dec, col_tile=tn_dec,
                            compute_dtype=compute_dtype)

    if fixed:
        mu = dec(h)
        return mu, h                              # torch returns (mu, x)

    if H % 2:
        raise ValueError("torch.chunk(h, 2, dim=2) with odd H is not supported")
    half = H // 2
    # torch.chunk on the feature axis: done ONCE here (cheap O(B*N*H) XLA
    # slice) instead of a lane-crossing slice inside the kernel per grid step.
    lr1 = h[..., :half]
    lr2 = h[..., half:]
    mu = dec(lr1)
    sigma = dec(lr2)
    return mu, sigma, h                           # torch returns (mu, sigma, x)


# ----------------------------- pure-JAX reference -------------------------------


def gnn_forward_ref(x, adj, w_gc1, *, fixed, compute_dtype=jnp.float32):
    cd = compute_dtype
    support = jnp.einsum("bnf,fh->bnh", x.astype(cd), w_gc1.astype(cd),
                         preferred_element_type=jnp.float32)
    h = jnp.einsum("bnm,bmh->bnh", adj.astype(cd), support.astype(cd),
                   preferred_element_type=jnp.float32)

    def dec(z):
        z = z.astype(cd)
        return jax.nn.relu(
            jnp.einsum("bnd,bmd->bnm", z, z, preferred_element_type=jnp.float32))

    if fixed:
        return dec(h), h
    half = h.shape[-1] // 2
    return dec(h[..., :half]), dec(h[..., half:]), h


# ----------------------------------- main ---------------------------------------

if __name__ == "__main__":
    # Module hyper-params (small, consistent with the __init__ signature).
    batch_size = 2
    num_nodes = 16
    nfeat = 8
    nhid = 32
    mu0, sigma0 = 0.0, 0.1

    key = jax.random.PRNGKey(0)
    kx, ka, kw = jax.random.split(key, 3)

    # Deterministic inputs / params.
    x = jax.random.normal(kx, (batch_size, num_nodes, nfeat), jnp.float32)
    adj_logits = jax.random.normal(ka, (batch_size, num_nodes, num_nodes), jnp.float32)
    adj = (adj_logits > 0.5).astype(jnp.float32)
    adj = 0.5 * (adj + jnp.transpose(adj, (0, 2, 1)))   # symmetric "adjacency"

    # gc1 weight ~ Normal(mu0, sigma0), shape (nfeat, nhid)
    w_gc1 = mu0 + sigma0 * jax.random.normal(kw, (nfeat, nhid), jnp.float32)

    # f32 path, both module configurations.
    for fixed in (True, False):
        out = jax.block_until_ready(gnn_forward(x, adj, w_gc1, fixed=fixed))
        ref = gnn_forward_ref(x, adj, w_gc1, fixed=fixed)
        for got, want in zip(out, ref):
            assert got.shape == want.shape, (got.shape, want.shape)
            assert jnp.allclose(got, want, atol=1e-4, rtol=1e-4), float(
                jnp.max(jnp.abs(got - want)))

    # bf16 MXU path (recommended on v6e / v7x), compared against a reference
    # applying the same bf16 input rounding (both accumulate in f32).
    out = jax.block_until_ready(
        gnn_forward(x, adj, w_gc1, fixed=False, compute_dtype=jnp.bfloat16))
    ref = gnn_forward_ref(x, adj, w_gc1, fixed=False, compute_dtype=jnp.bfloat16)
    for got, want in zip(out, ref):
        assert got.shape == want.shape, (got.shape, want.shape)
        assert jnp.allclose(got, want, atol=1e-2, rtol=1e-2), float(
            jnp.max(jnp.abs(got - want)))

    print("KERNEL_OK")
</pallas_src>

<mosaic_0001>
module attributes {stable_mosaic.version = 11 : i64} {
  func.func @_inner_product_relu_kernel(%arg0: i32, %arg1: i32, %arg2: i32, %arg3: memref<2x16x32xf32, #tpu.memory_space<vmem>>, %arg4: memref<2x16x32xf32, #tpu.memory_space<vmem>>, %arg5: memref<2x16x16xf32, #tpu.memory_space<vmem>>) attributes {dimension_semantics = [#tpu.dimension_semantics<parallel>, #tpu.dimension_semantics<parallel>, #tpu.dimension_semantics<parallel>], iteration_bounds = array<i64: 1, 1, 1>, scalar_prefetch = 0 : i64, scratch_operands = 0 : i64, tpu.core_type = #tpu.core_type<tc>, window_params = [{transform_indices = @transform_0, window_bounds = array<i64: 2, 16, 32>}, {transform_indices = @transform_1, window_bounds = array<i64: 2, 16, 32>}, {transform_indices = @transform_2, window_bounds = array<i64: 2, 16, 16>}]} {
    %c0 = arith.constant 0 : index
    %c0_0 = arith.constant 0 : index
    %c0_1 = arith.constant 0 : index
    %0 = vector.load %arg3[%c0, %c0_0, %c0_1] : memref<2x16x32xf32, #tpu.memory_space<vmem>>, vector<2x16x32xf32>
    %c0_2 = arith.constant 0 : index
    %c0_3 = arith.constant 0 : index
    %c0_4 = arith.constant 0 : index
    %1 = vector.load %arg4[%c0_2, %c0_3, %c0_4] : memref<2x16x32xf32, #tpu.memory_space<vmem>>, vector<2x16x32xf32>
    "tpu.trace_start"() <{level = 10 : i32, message = "bid,bjd->bij"}> : () -> ()
    %cst = arith.constant dense<0.000000e+00> : vector<2x16x16xf32>
    %2 = tpu.matmul %0, %1, %cst {dimension_numbers = #tpu.dot_dimension_numbers<[2], [2], [1], [1], [0, 0, 0, 1, 1, 1], [0], [0]>} : vector<2x16x32xf32>, vector<2x16x32xf32>, vector<2x16x16xf32> -> vector<2x16x16xf32>
    "tpu.trace_stop"() : () -> ()
    %cst_5 = arith.constant 0.000000e+00 : f32
    %3 = vector.broadcast %cst_5 : f32 to vector<2x16x16xf32>
    %4 = arith.maximumf %2, %3 : vector<2x16x16xf32>
    %c0_6 = arith.constant 0 : index
    %c0_7 = arith.constant 0 : index
    %c0_8 = arith.constant 0 : index
    %5 = vector.load %arg5[%c0_6, %c0_7, %c0_8] : memref<2x16x16xf32, #tpu.memory_space<vmem>>, vector<2x16x16xf32>
    tpu.vector_store %arg5[%c0_6, %c0_7, %c0_8], %4 {strides = array<i32>} : memref<2x16x16xf32, #tpu.memory_space<vmem>>, vector<2x16x16xf32>,
    return
  }
  func.func @transform_0(%arg0: i32, %arg1: i32, %arg2: i32) -> (i32, i32, i32) {
    %c0_i32 = arith.constant 0 : i32
    %c0_i32_0 = arith.constant 0 : i32
    return %arg0, %arg1, %c0_i32 : i32, i32, i32
  }
  func.func @transform_1(%arg0: i32, %arg1: i32, %arg2: i32) -> (i32, i32, i32) {
    %c0_i32 = arith.constant 0 : i32
    %c0_i32_0 = arith.constant 0 : i32
    return %arg0, %arg2, %c0_i32 : i32, i32, i32
  }
  func.func @transform_2(%arg0: i32, %arg1: i32, %arg2: i32) -> (i32, i32, i32) {
    %c0_i32 = arith.constant 0 : i32
    return %arg0, %arg1, %arg2 : i32, i32, i32
  }
}

module attributes {stable_mosaic.version = 11 : i64} {
  func.func @_graph_conv_kernel(%arg0: i32, %arg1: i32, %arg2: memref<2x16x8xf32, #tpu.memory_space<vmem>>, %arg3: memref<2x16x16xf32, #tpu.memory_space<vmem>>, %arg4: memref<8x32xf32, #tpu.memory_space<vmem>>, %arg5: memref<2x16x32xf32, #tpu.memory_space<vmem>>, %arg6: memref<2x16x32xf32, #tpu.memory_space<vmem>>) attributes {dimension_semantics = [#tpu.dimension_semantics<parallel>, #tpu.dimension_semantics<arbitrary>], iteration_bounds = array<i64: 1, 1>, scalar_prefetch = 0 : i64, scratch_operands = 1 : i64, tpu.core_type = #tpu.core_type<tc>, window_params = [{transform_indices = @transform_0, window_bounds = array<i64: 2, 16, 8>}, {transform_indices = @transform_1, window_bounds = array<i64: 2, 16, 16>}, {pipeline_mode = #tpu.pipeline_mode<synchronous>, transform_indices = @transform_2, window_bounds = array<i64: 8, 32>}, {transform_indices = @transform_3, window_bounds = array<i64: 2, 16, 32>}]} {
    %c0_i32 = arith.constant 0 : i32
    %0 = arith.cmpi eq, %arg1, %c0_i32 : i32
    %1 = arith.extui %0 : i1 to i32
    %c0_i32_0 = arith.constant 0 : i32
    %2 = arith.cmpi ne, %1, %c0_i32_0 : i32
    scf.if %2 {
      %c0_9 = arith.constant 0 : index
      %c0_10 = arith.constant 0 : index
      %7 = vector.load %arg4[%c0_9, %c0_10] : memref<8x32xf32, #tpu.memory_space<vmem>>, vector<8x32xf32>
      %c0_11 = arith.constant 0 : index
      %c0_12 = arith.constant 0 : index
      %c0_13 = arith.constant 0 : index
      %8 = vector.load %arg2[%c0_11, %c0_12, %c0_13] : memref<2x16x8xf32, #tpu.memory_space<vmem>>, vector<1x16x8xf32>
      %9 = vector.shape_cast %8 : vector<1x16x8xf32> to vector<16x8xf32>
      %cst_14 = arith.constant dense<0.000000e+00> : vector<16x32xf32>
      %10 = tpu.matmul %9, %7, %cst_14 {dimension_numbers = #tpu.dot_dimension_numbers<[1], [0], [0], [1], [0, 0, 1, 1], [], []>} : vector<16x8xf32>, vector<8x32xf32>, vector<16x32xf32> -> vector<16x32xf32>
      %c0_15 = arith.constant 0 : index
      %c0_16 = arith.constant 0 : index
      %c0_17 = arith.constant 0 : index
      %11 = vector.load %arg6[%c0_15, %c0_16, %c0_17] : memref<2x16x32xf32, #tpu.memory_space<vmem>>, vector<1x16x32xf32>
      %12 = vector.shape_cast %11 : vector<1x16x32xf32> to vector<16x32xf32>
      %13 = vector.shape_cast %10 : vector<16x32xf32> to vector<1x16x32xf32>
      tpu.vector_store %arg6[%c0_15, %c0_16, %c0_17], %13 {strides = array<i32>} : memref<2x16x32xf32, #tpu.memory_space<vmem>>, vector<1x16x32xf32>,
      %c1 = arith.constant 1 : index
      %c0_18 = arith.constant 0 : index
      %c0_19 = arith.constant 0 : index
      %14 = vector.load %arg2[%c1, %c0_18, %c0_19] : memref<2x16x8xf32, #tpu.memory_space<vmem>>, vector<1x16x8xf32>
      %15 = vector.shape_cast %14 : vector<1x16x8xf32> to vector<16x8xf32>
      %cst_20 = arith.constant dense<0.000000e+00> : vector<16x32xf32>
      %16 = tpu.matmul %15, %7, %cst_20 {dimension_numbers = #tpu.dot_dimension_numbers<[1], [0], [0], [1], [0, 0, 1, 1], [], []>} : vector<16x8xf32>, vector<8x32xf32>, vector<16x32xf32> -> vector<16x32xf32>
      %c1_21 = arith.constant 1 : index
      %c0_22 = arith.constant 0 : index
      %c0_23 = arith.constant 0 : index
      %17 = vector.load %arg6[%c1_21, %c0_22, %c0_23] : memref<2x16x32xf32, #tpu.memory_space<vmem>>, vector<1x16x32xf32>
      %18 = vector.shape_cast %17 : vector<1x16x32xf32> to vector<16x32xf32>
      %19 = vector.shape_cast %16 : vector<16x32xf32> to vector<1x16x32xf32>
      tpu.vector_store %arg6[%c1_21, %c0_22, %c0_23], %19 {strides = array<i32>} : memref<2x16x32xf32, #tpu.memory_space<vmem>>, vector<1x16x32xf32>,
    } else {
    }
    %c0 = arith.constant 0 : index
    %c0_1 = arith.constant 0 : index
    %c0_2 = arith.constant 0 : index
    %3 = vector.load %arg3[%c0, %c0_1, %c0_2] : memref<2x16x16xf32, #tpu.memory_space<vmem>>, vector<2x16x16xf32>
    %c0_3 = arith.constant 0 : index
    %c0_4 = arith.constant 0 : index
    %c0_5 = arith.constant 0 : index
    %4 = vector.load %arg6[%c0_3, %c0_4, %c0_5] : memref<2x16x32xf32, #tpu.memory_space<vmem>>, vector<2x16x32xf32>
    "tpu.trace_start"() <{level = 10 : i32, message = "btn,bnh->bth"}> : () -> ()
    %cst = arith.constant dense<0.000000e+00> : vector<2x16x32xf32>
    %5 = tpu.matmul %3, %4, %cst {dimension_numbers = #tpu.dot_dimension_numbers<[2], [1], [1], [2], [0, 0, 0, 1, 1, 2], [0], [0]>} : vector<2x16x16xf32>, vector<2x16x32xf32>, vector<2x16x32xf32> -> vector<2x16x32xf32>
    "tpu.trace_stop"() : () -> ()
    %c0_6 = arith.constant 0 : index
    %c0_7 = arith.constant 0 : index
    %c0_8 = arith.constant 0 : index
    %6 = vector.load %arg5[%c0_6, %c0_7, %c0_8] : memref<2x16x32xf32, #tpu.memory_space<vmem>>, vector<2x16x32xf32>
    tpu.vector_store %arg5[%c0_6, %c0_7, %c0_8], %5 {strides = array<i32>} : memref<2x16x32xf32, #tpu.memory_space<vmem>>, vector<2x16x32xf32>,
    return
  }
  func.func @transform_0(%arg0: i32, %arg1: i32) -> (i32, i32, i32) {
    %c0_i32 = arith.constant 0 : i32
    %c0_i32_0 = arith.constant 0 : i32
    %c0_i32_1 = arith.constant 0 : i32
    return %arg0, %c0_i32, %c0_i32_0 : i32, i32, i32
  }
  func.func @transform_1(%arg0: i32, %arg1: i32) -> (i32, i32, i32) {
    %c0_i32 = arith.constant 0 : i32
    %c0_i32_0 = arith.constant 0 : i32
    return %arg0, %arg1, %c0_i32 : i32, i32, i32
  }
  func.func @transform_2(%arg0: i32, %arg1: i32) -> (i32, i32) {
    %c0_i32 = arith.constant 0 : i32
    %c0_i32_0 = arith.constant 0 : i32
    %c0_i32_1 = arith.constant 0 : i32
    return %c0_i32, %c0_i32_0 : i32, i32
  }
  func.func @transform_3(%arg0: i32, %arg1: i32) -> (i32, i32, i32) {
    %c0_i32 = arith.constant 0 : i32
    %c0_i32_0 = arith.constant 0 : i32
    return %arg0, %arg1, %c0_i32 : i32, i32, i32
  }
}

</mosaic_0001>

<llo_original>
// kernel: gnn_forward.2
$region0: #{gnn_forward.2}
  #allocation0 [shape = 'u32[]', space=smem, size = 0x4, offset = 0x4, fixed_abs, tag = 'smem constant byte address 0x4 - core index']
  #allocation1 [shape = 'u32[144,128]{1,0:T(1,128)}', space=vmem, size = 0x12000, scoped, tag = 'internal scratch']
  #allocation2 [shape = 'f32[2,16,32]{2,1,0:T(8,128)}', space=vmem, size = 0x4000, scoped, tag = 'scratch operand']
  %s0 = inlined_call_operand.vmem [shape: f32[2,16,8], index: 0, kind: input, shape index: {}]
  %s1 = inlined_call_operand.vmem [shape: f32[2,16,16], index: 1, kind: input, shape index: {}]
  %s2 = inlined_call_operand.vmem [shape: f32[8,32], index: 2, kind: input, shape index: {}]
  %s3 = inlined_call_operand.vmem [shape: f32[2,16,32], index: 3, kind: output, shape index: {}]
  %s4 = sld [smem:[#allocation0]]
  $region26: #{gnn_forward.2} parent=0
    _
  %s6 = ssub.s32 1, %s4
  %s7 = scalar_select 0, %s6, %s4
  // Predicated region
  $region2: #{gnn_forward.2} parent=0 // pred_check
    _
  $region3: #{gnn_forward.2} parent=0 // pred_check_branch
    %9 = sbr.rel (0) target = $region5
  $region4: #{gnn_forward.2} parent=0 // pred_region
    _
  $region5: #{gnn_forward.2} parent=0 // pred_fallthru
    _
  // Predicated region
  $region6: #{gnn_forward.2} parent=0 // pred_check
    _
  $region7: #{gnn_forward.2} parent=0 // pred_check_branch
    %11 = sbr.rel (0) target = $region9
  $region8: #{gnn_forward.2} parent=0 // pred_region
    _
  $region9: #{gnn_forward.2} parent=0 // pred_fallthru
    _
  // Predicated region
  $region10: #{gnn_forward.2} parent=0 // pred_check
    _
  $region11: #{gnn_forward.2} parent=0 // pred_check_branch
    %13 = sbr.rel (0) target = $region13
  $region12: #{gnn_forward.2} parent=0 // pred_region
    _
  $region13: #{gnn_forward.2} parent=0 // pred_fallthru
    _
  %p14 = scmp.eq.s32.totalorder 0, 0
  // Predicated region
  $region14: #{gnn_forward.2} parent=0 // pred_check
    %p15 = pneg %p14
  $region15: #{gnn_forward.2} parent=0 // pred_check_branch
    %17 = sbr.rel (%p15) target = $region17
  $region16: #{gnn_forward.2} parent=0 // pred_region
    %v18 = vld [vmem:[%s2] sm:$0xff]
    %v19 = vld [vmem:[%s0] sm:$0xff]
    %v20 = vld [vmem:[%s0 + $0x8] sm:$0xff]
    %vm21 = vcmask 64512
    %v23 = vsel %vm21, %v19, 0
    %v26 = vsel %vm21, %v20, 0
    %28 = vmatprep.subr.mxu0 0.0
    %29 = vmatpush1.msra.mxu0 %v18
    %30 = vmatprep.subr.mxu0 0.0
    %31 = vmatpush1.msra.mxu0 0.0
    %32 = vmatprep.subr.mxu0 0.0
    %33 = vmatpush1.msra.mxu0 0.0
    %34 = vmatprep.subr.mxu0 0.0
    %35 = vmatpush1.msra.mxu0 0.0
    %36 = vmatprep.subr.mxu0 0.0
    %37 = vmatpush1.msra.mxu0 0.0
    %38 = vmatprep.subr.mxu0 0.0
    %39 = vmatpush1.msra.mxu0 0.0
    %40 = vmatprep.subr.mxu0 0.0
    %41 = vmatpush1.msra.mxu0 0.0
    %42 = vmatprep.subr.mxu0 0.0
    %43 = vmatpush1.msra.mxu0 0.0
    %44 = vmatprep.subr.mxu0 0.0
    %45 = vmatpush1.msra.mxu0 0.0
    %46 = vmatprep.subr.mxu0 0.0
    %47 = vmatpush1.msra.mxu0 0.0
    %48 = vmatprep.subr.mxu0 0.0
    %49 = vmatpush1.msra.mxu0 0.0
    %50 = vmatprep.subr.mxu0 0.0
    %51 = vmatpush1.msra.mxu0 0.0
    %52 = vmatprep.subr.mxu0 0.0
    %53 = vmatpush1.msra.mxu0 0.0
    %54 = vmatprep.subr.mxu0 0.0
    %55 = vmatpush1.msra.mxu0 0.0
    %56 = vmatprep.subr.mxu0 0.0
    %57 = vmatpush1.msra.mxu0 0.0
    %58 = vmatprep.subr.mxu0 0.0
    %59 = vmatpush1.msra.mxu0 0.0
    %60 = vmatprep.subr.mxu0 0.0
    %61 = vmatpush1.msra.mxu0 0.0
    %62 = vmatprep.subr.mxu0 0.0
    %63 = vmatpush1.msra.mxu0 0.0
    %64 = vmatprep.subr.mxu0 0.0
    %65 = vmatpush1.msra.mxu0 0.0
    %66 = vmatprep.subr.mxu0 0.0
    %67 = vmatpush1.msra.mxu0 0.0
    %68 = vmatprep.subr.mxu0 0.0
    %69 = vmatpush1.msra.mxu0 0.0
    %70 = vmatprep.subr.mxu0 0.0
    %71 = vmatpush1.msra.mxu0 0.0
    %72 = vmatprep.subr.mxu0 0.0
    %73 = vmatpush1.msra.mxu0 0.0
    %74 = vmatprep.subr.mxu0 0.0
    %75 = vmatpush1.msra.mxu0 0.0
    %76 = vmatprep.subr.mxu0 0.0
    %77 = vmatpush1.msra.mxu0 0.0
    %78 = vmatprep.subr.mxu0 0.0
    %79 = vmatpush1.msra.mxu0 0.0
    %80 = vmatprep.subr.mxu0 0.0
    %81 = vmatpush1.msra.mxu0 0.0
    %82 = vmatprep.subr.mxu0 0.0
    %83 = vmatpush1.msra.mxu0 0.0
    %84 = vmatprep.subr.mxu0 0.0
    %85 = vmatpush1.msra.mxu0 0.0
    %86 = vmatprep.subr.mxu0 0.0
    %87 = vmatpush1.msra.mxu0 0.0
    %88 = vmatprep.subr.mxu0 0.0
    %89 = vmatpush1.msra.mxu0 0.0
    %90 = vmatprep.subr.mxu0 0.0
    %91 = vmatpush1.msra.mxu0 0.0
    %92 = vmatprep.mubr.f32.mxu0 0.0
    %93 = vmatmul.mubr.f32.gmra.mrb[0].mxu0 %v23
    %v94 = vpop.f32.mrb[0].mxu0
    %v95 = vadd.f32 0.0, %v94
    %v96 = vpop.f32.mrb[0].mxu0
    %97 = vmatprep.mubr.f32.mxu0 0.0
    %98 = vmatmul.mubr.f32.gmra.mrb[0].mxu0 %v26
    %v99 = vpop.f32.mrb[0].mxu0
    %v100 = vadd.f32 0.0, %v99
    %v101 = vpop.f32.mrb[0].mxu0
    %102 = vdwg.mxu0
    %vm103 = vcmask 261120
    %104 = vst.msk [vmem:[#allocation2] sm:$0xff] %vm103, %v95
    %105 = vst.msk [vmem:[#allocation2 + $0x8] sm:$0xff] %vm103, %v100
    %s106 = scalar_lea.vmem %s0, 16
    %v107 = vld [vmem:[%s106] sm:$0xff]
    %v108 = vld [vmem:[%s106 + $0x8] sm:$0xff]
    %v110 = vsel %vm21, %v107, 0
    %v113 = vsel %vm21, %v108, 0
    %115 = vmatprep.subr.mxu0 0.0
    %116 = vmatpush1.msra.mxu0 %v18
    %117 = vmatprep.subr.mxu0 0.0
    %118 = vmatpush1.msra.mxu0 0.0
    %119 = vmatprep.subr.mxu0 0.0
    %120 = vmatpush1.msra.mxu0 0.0
    %121 = vmatprep.subr.mxu0 0.0
    %122 = vmatpush1.msra.mxu0 0.0
    %123 = vmatprep.subr.mxu0 0.0
    %124 = vmatpush1.msra.mxu0 0.0
    %125 = vmatprep.subr.mxu0 0.0
    %126 = vmatpush1.msra.mxu0 0.0
    %127 = vmatprep.subr.mxu0 0.0
    %128 = vmatpush1.msra.mxu0 0.0
    %129 = vmatprep.subr.mxu0 0.0
    %130 = vmatpush1.msra.mxu0 0.0
    %131 = vmatprep.subr.mxu0 0.0
    %132 = vmatpush1.msra.mxu0 0.0
    %133 = vmatprep.subr.mxu0 0.0
    %134 = vmatpush1.msra.mxu0 0.0
    %135 = vmatprep.subr.mxu0 0.0
    %136 = vmatpush1.msra.mxu0 0.0
    %137 = vmatprep.subr.mxu0 0.0
    %138 = vmatpush1.msra.mxu0 0.0
    %139 = vmatprep.subr.mxu0 0.0
    %140 = vmatpush1.msra.mxu0 0.0
    %141 = vmatprep.subr.mxu0 0.0
    %142 = vmatpush1.msra.mxu0 0.0
    %143 = vmatprep.subr.mxu0 0.0
    %144 = vmatpush1.msra.mxu0 0.0
    %145 = vmatprep.subr.mxu0 0.0
    %146 = vmatpush1.msra.mxu0 0.0
    %147 = vmatprep.subr.mxu0 0.0
    %148 = vmatpush1.msra.mxu0 0.0
    %149 = vmatprep.subr.mxu0 0.0
    %150 = vmatpush1.msra.mxu0 0.0
    %151 = vmatprep.subr.mxu0 0.0
    %152 = vmatpush1.msra.mxu0 0.0
    %153 = vmatprep.subr.mxu0 0.0
    %154 = vmatpush1.msra.mxu0 0.0
    %155 = vmatprep.subr.mxu0 0.0
    %156 = vmatpush1.msra.mxu0 0.0
    %157 = vmatprep.subr.mxu0 0.0
    %158 = vmatpush1.msra.mxu0 0.0
    %159 = vmatprep.subr.mxu0 0.0
    %160 = vmatpush1.msra.mxu0 0.0
    %161 = vmatprep.subr.mxu0 0.0
    %162 = vmatpush1.msra.mxu0 0.0
    %163 = vmatprep.subr.mxu0 0.0
    %164 = vmatpush1.msra.mxu0 0.0
    %165 = vmatprep.subr.mxu0 0.0
    %166 = vmatpush1.msra.mxu0 0.0
    %167 = vmatprep.subr.mxu0 0.0
    %168 = vmatpush1.msra.mxu0 0.0
    %169 = vmatprep.subr.mxu0 0.0
    %170 = vmatpush1.msra.mxu0 0.0
    %171 = vmatprep.subr.mxu0 0.0
    %172 = vmatpush1.msra.mxu0 0.0
    %173 = vmatprep.subr.mxu0 0.0
    %174 = vmatpush1.msra.mxu0 0.0
    %175 = vmatprep.subr.mxu0 0.0
    %176 = vmatpush1.msra.mxu0 0.0
    %177 = vmatprep.subr.mxu0 0.0
    %178 = vmatpush1.msra.mxu0 0.0
    %179 = vmatprep.mubr.f32.mxu0 0.0
    %180 = vmatmul.mubr.f32.gmra.mrb[0].mxu0 %v110
    %v181 = vpop.f32.mrb[0].mxu0
    %v182 = vadd.f32 0.0, %v181
    %v183 = vpop.f32.mrb[0].mxu0
    %184 = vmatprep.mubr.f32.mxu0 0.0
    %185 = vmatmul.mubr.f32.gmra.mrb[0].mxu0 %v113
    %v186 = vpop.f32.mrb[0].mxu0
    %v187 = vadd.f32 0.0, %v186
    %v188 = vpop.f32.mrb[0].mxu0
    %189 = vdwg.mxu0
    %s190 = scalar_lea.vmem [#allocation2], 16
    %191 = vst.msk [vmem:[%s190] sm:$0xff] %vm103, %v182
    %192 = vst.msk [vmem:[%s190 + $0x8] sm:$0xff] %vm103, %v187
  $region17: #{gnn_forward.2} parent=0 // pred_fallthru
    _
  %v193 = vld [vmem:[%s1] sm:$0xff]
  %v194 = vld [vmem:[%s1 + $0x8] sm:$0xff]
  %v195 = vld [vmem:[%s1 + $0x10] sm:$0xff]
  %v196 = vld [vmem:[%s1 + $0x18] sm:$0xff]
  %v197 = vld [vmem:[#allocation2] sm:$0xff]
  %v198 = vld [vmem:[#allocation2 + $0x8] sm:$0xff]
  %v199 = vld [vmem:[#allocation2 + $0x10] sm:$0xff]
  %v200 = vld [vmem:[#allocation2 + $0x18] sm:$0xff]
  %vm201 = vcmask 130048
  %v203 = vsel %vm201, %v193, 0
  %v206 = vsel %vm201, %v194, 0
  %208 = vmatprep.subr.mxu0 0.0
  %209 = vmatpush1.msra.mxu0 %v197
  %210 = vmatprep.subr.mxu0 0.0
  %211 = vmatpush1.msra.mxu0 %v198
  %212 = vmatprep.subr.mxu0 0.0
  %213 = vmatpush1.msra.mxu0 0.0
  %214 = vmatprep.subr.mxu0 0.0
  %215 = vmatpush1.msra.mxu0 0.0
  %216 = vmatprep.subr.mxu0 0.0
  %217 = vmatpush1.msra.mxu0 0.0
  %218 = vmatprep.subr.mxu0 0.0
  %219 = vmatpush1.msra.mxu0 0.0
  %220 = vmatprep.subr.mxu0 0.0
  %221 = vmatpush1.msra.mxu0 0.0
  %222 = vmatprep.subr.mxu0 0.0
  %223 = vmatpush1.msra.mxu0 0.0
  %224 = vmatprep.subr.mxu0 0.0
  %225 = vmatpush1.msra.mxu0 0.0
  %226 = vmatprep.subr.mxu0 0.0
  %227 = vmatpush1.msra.mxu0 0.0
  %228 = vmatprep.subr.mxu0 0.0
  %229 = vmatpush1.msra.mxu0 0.0
  %230 = vmatprep.subr.mxu0 0.0
  %231 = vmatpush1.msra.mxu0 0.0
  %232 = vmatprep.subr.mxu0 0.0
  %233 = vmatpush1.msra.mxu0 0.0
  %234 = vmatprep.subr.mxu0 0.0
  %235 = vmatpush1.msra.mxu0 0.0
  %236 = vmatprep.subr.mxu0 0.0
  %237 = vmatpush1.msra.mxu0 0.0
  %238 = vmatprep.subr.mxu0 0.0
  %239 = vmatpush1.msra.mxu0 0.0
  %240 = vmatprep.subr.mxu0 0.0
  %241 = vmatpush1.msra.mxu0 0.0
  %242 = vmatprep.subr.mxu0 0.0
  %243 = vmatpush1.msra.mxu0 0.0
  %244 = vmatprep.subr.mxu0 0.0
  %245 = vmatpush1.msra.mxu0 0.0
  %246 = vmatprep.subr.mxu0 0.0
  %247 = vmatpush1.msra.mxu0 0.0
  %248 = vmatprep.subr.mxu0 0.0
  %249 = vmatpush1.msra.mxu0 0.0
  %250 = vmatprep.subr.mxu0 0.0
  %251 = vmatpush1.msra.mxu0 0.0
  %252 = vmatprep.subr.mxu0 0.0
  %253 = vmatpush1.msra.mxu0 0.0
  %254 = vmatprep.subr.mxu0 0.0
  %255 = vmatpush1.msra.mxu0 0.0
  %256 = vmatprep.subr.mxu0 0.0
  %257 = vmatpush1.msra.mxu0 0.0
  %258 = vmatprep.subr.mxu0 0.0
  %259 = vmatpush1.msra.mxu0 0.0
  %260 = vmatprep.subr.mxu0 0.0
  %261 = vmatpush1.msra.mxu0 0.0
  %262 = vmatprep.subr.mxu0 0.0
  %263 = vmatpush1.msra.mxu0 0.0
  %264 = vmatprep.subr.mxu0 0.0
  %265 = vmatpush1.msra.mxu0 0.0
  %266 = vmatprep.subr.mxu0 0.0
  %267 = vmatpush1.msra.mxu0 0.0
  %268 = vmatprep.subr.mxu0 0.0
  %269 = vmatpush1.msra.mxu0 0.0
  %270 = vmatprep.subr.mxu0 0.0
  %271 = vmatpush1.msra.mxu0 0.0
  %272 = vmatprep.mubr.f32.mxu0 0.0
  %273 = vmatmul.mubr.f32.gmra.mrb[0].mxu0 %v203
  %v274 = vpop.f32.mrb[0].mxu0
  %v275 = vadd.f32 0.0, %v274
  %v276 = vpop.f32.mrb[0].mxu0
  %277 = vmatprep.mubr.f32.mxu0 0.0
  %278 = vmatmul.mubr.f32.gmra.mrb[0].mxu0 %v206
  %v279 = vpop.f32.mrb[0].mxu0
  %v280 = vadd.f32 0.0, %v279
  %v281 = vpop.f32.mrb[0].mxu0
  %282 = vdwg.mxu0
  %v284 = vsel %vm201, %v195, 0
  %v287 = vsel %vm201, %v196, 0
  %289 = vmatprep.subr.mxu0 0.0
  %290 = vmatpush1.msra.mxu0 %v199
  %291 = vmatprep.subr.mxu0 0.0
  %292 = vmatpush1.msra.mxu0 %v200
  %293 = vmatprep.subr.mxu0 0.0
  %294 = vmatpush1.msra.mxu0 0.0
  %295 = vmatprep.subr.mxu0 0.0
  %296 = vmatpush1.msra.mxu0 0.0
  %297 = vmatprep.subr.mxu0 0.0
  %298 = vmatpush1.msra.mxu0 0.0
  %299 = vmatprep.subr.mxu0 0.0
  %300 = vmatpush1.msra.mxu0 0.0
  %301 = vmatprep.subr.mxu0 0.0
  %302 = vmatpush1.msra.mxu0 0.0
  %303 = vmatprep.subr.mxu0 0.0
  %304 = vmatpush1.msra.mxu0 0.0
  %305 = vmatprep.subr.mxu0 0.0
  %306 = vmatpush1.msra.mxu0 0.0
  %307 = vmatprep.subr.mxu0 0.0
  %308 = vmatpush1.msra.mxu0 0.0
  %309 = vmatprep.subr.mxu0 0.0
  %310 = vmatpush1.msra.mxu0 0.0
  %311 = vmatprep.subr.mxu0 0.0
  %312 = vmatpush1.msra.mxu0 0.0
  %313 = vmatprep.subr.mxu0 0.0
  %314 = vmatpush1.msra.mxu0 0.0
  %315 = vmatprep.subr.mxu0 0.0
  %316 = vmatpush1.msra.mxu0 0.0
  %317 = vmatprep.subr.mxu0 0.0
  %318 = vmatpush1.msra.mxu0 0.0
  %319 = vmatprep.subr.mxu0 0.0
  %320 = vmatpush1.msra.mxu0 0.0
  %321 = vmatprep.subr.mxu0 0.0
  %322 = vmatpush1.msra.mxu0 0.0
  %323 = vmatprep.subr.mxu0 0.0
  %324 = vmatpush1.msra.mxu0 0.0
  %325 = vmatprep.subr.mxu0 0.0
  %326 = vmatpush1.msra.mxu0 0.0
  %327 = vmatprep.subr.mxu0 0.0
  %328 = vmatpush1.msra.mxu0 0.0
  %329 = vmatprep.subr.mxu0 0.0
  %330 = vmatpush1.msra.mxu0 0.0
  %331 = vmatprep.subr.mxu0 0.0
  %332 = vmatpush1.msra.mxu0 0.0
  %333 = vmatprep.subr.mxu0 0.0
  %334 = vmatpush1.msra.mxu0 0.0
  %335 = vmatprep.subr.mxu0 0.0
  %336 = vmatpush1.msra.mxu0 0.0
  %337 = vmatprep.subr.mxu0 0.0
  %338 = vmatpush1.msra.mxu0 0.0
  %339 = vmatprep.subr.mxu0 0.0
  %340 = vmatpush1.msra.mxu0 0.0
  %341 = vmatprep.subr.mxu0 0.0
  %342 = vmatpush1.msra.mxu0 0.0
  %343 = vmatprep.subr.mxu0 0.0
  %344 = vmatpush1.msra.mxu0 0.0
  %345 = vmatprep.subr.mxu0 0.0
  %346 = vmatpush1.msra.mxu0 0.0
  %347 = vmatprep.subr.mxu0 0.0
  %348 = vmatpush1.msra.mxu0 0.0
  %349 = vmatprep.subr.mxu0 0.0
  %350 = vmatpush1.msra.mxu0 0.0
  %351 = vmatprep.subr.mxu0 0.0
  %352 = vmatpush1.msra.mxu0 0.0
  %353 = vmatprep.mubr.f32.mxu0 0.0
  %354 = vmatmul.mubr.f32.gmra.mrb[0].mxu0 %v284
  %v355 = vpop.f32.mrb[0].mxu0
  %v356 = vadd.f32 0.0, %v355
  %v357 = vpop.f32.mrb[0].mxu0
  %358 = vmatprep.mubr.f32.mxu0 0.0
  %359 = vmatmul.mubr.f32.gmra.mrb[0].mxu0 %v287
  %v360 = vpop.f32.mrb[0].mxu0
  %v361 = vadd.f32 0.0, %v360
  %v362 = vpop.f32.mrb[0].mxu0
  %363 = vdwg.mxu0
  %vm364 = vcmask 261120
  %365 = vst.msk [vmem:[%s3] sm:$0xff] %vm364, %v275
  %366 = vst.msk [vmem:[%s3 + $0x8] sm:$0xff] %vm364, %v280
  %367 = vst.msk [vmem:[%s3 + $0x10] sm:$0xff] %vm364, %v356
  %368 = vst.msk [vmem:[%s3 + $0x18] sm:$0xff] %vm364, %v361
  // Predicated region
  $region18: #{gnn_forward.2} parent=0 // pred_check
    _
  $region19: #{gnn_forward.2} parent=0 // pred_check_branch
    %370 = sbr.rel (0) target = $region21
  $region20: #{gnn_forward.2} parent=0 // pred_region
    _
  $region21: #{gnn_forward.2} parent=0 // pred_fallthru
    _
  // Predicated region
  $region22: #{gnn_forward.2} parent=0 // pred_check
    _
  $region23: #{gnn_forward.2} parent=0 // pred_check_branch
    %372 = sbr.rel (0) target = $region25
  $region24: #{gnn_forward.2} parent=0 // pred_region
    _
  $region25: #{gnn_forward.2} parent=0 // pred_fallthru
    _

// kernel: gnn_forward.3
$region0: #{gnn_forward.3}
  #allocation0 [shape = 'u32[]', space=smem, size = 0x4, offset = 0x4, fixed_abs, tag = 'smem constant byte address 0x4 - core index']
  #allocation1 [shape = 'u32[144,128]{1,0:T(1,128)}', space=vmem, size = 0x12000, scoped, tag = 'internal scratch']
  %s0 = inlined_call_operand.vmem [shape: f32[2,16,32], index: 0, kind: input, shape index: {}, may-alias: {0,1}]
  %s1 = inlined_call_operand.vmem [shape: f32[2,16,32], index: 1, kind: input, shape index: {}, may-alias: {0,1}]
  %s2 = inlined_call_operand.hbm [shape: f32[2,16,16], index: 2, kind: output, shape index: {}]
  %s3 = sld [smem:[#allocation0]]
  $region18: #{gnn_forward.3} parent=0
    _
  %s5 = ssub.s32 1, %s3
  %s6 = scalar_select 0, %s5, %s3
  $region1: #{gnn_forward.3} parent=0
    #allocation2 [shape = 'u8[16384]{0}', space=vmem, size = 0x4000, scoped, tag = 'output window, operand 0, single buffered']
    #allocation3 [shape = 's32[1]{0}', space=sflag, size = 0x4, scoped, tag = 'scoped memory for gnn_forward.3']
    %7 = vsyncpa [#allocation3], 0
    // Predicated region
    $region2: #{gnn_forward.3} parent=1 // pred_check
      _
    $region3: #{gnn_forward.3} parent=1 // pred_check_branch
      %9 = sbr.rel (0) target = $region5
    $region4: #{gnn_forward.3} parent=1 // pred_region
      _
    $region5: #{gnn_forward.3} parent=1 // pred_fallthru
      _
    // Predicated region
    $region6: #{gnn_forward.3} parent=1 // pred_check
      _
    $region7: #{gnn_forward.3} parent=1 // pred_check_branch
      %11 = sbr.rel (0) target = $region9
    $region8: #{gnn_forward.3} parent=1 // pred_region
      _
    $region9: #{gnn_forward.3} parent=1 // pred_fallthru
      _
    %v12 = vld [vmem:[%s0] sm:$0xff]
    %v13 = vld [vmem:[%s0 + $0x8] sm:$0xff]
    %v14 = vld [vmem:[%s0 + $0x10] sm:$0xff]
    %v15 = vld [vmem:[%s0 + $0x18] sm:$0xff]
    %v16 = vld [vmem:[%s1] sm:$0xff]
    %v17 = vld [vmem:[%s1 + $0x8] sm:$0xff]
    %v18 = vld [vmem:[%s1 + $0x10] sm:$0xff]
    %v19 = vld [vmem:[%s1 + $0x18] sm:$0xff]
    %vm20 = vcmask 261120
    %v22 = vsel %vm20, %v12, 0
    %v25 = vsel %vm20, %v13, 0
    %v28 = vsel %vm20, %v16, 0
    %v31 = vsel %vm20, %v17, 0
    %33 = vmatprep.subr.mxu0 0.0
    %34 = vmatpush1.xpose.msra.mxu0 %v28
    %35 = vmatprep.subr.mxu0 0.0
    %36 = vmatpush1.xpose.msra.mxu0 %v31
    %37 = vmatprep.subr.mxu0 0.0
    %38 = vmatpush1.xpose.msra.mxu0 0.0
    %39 = vmatprep.subr.mxu0 0.0
    %40 = vmatpush1.xpose.msra.mxu0 0.0
    %41 = vmatprep.subr.mxu0 0.0
    %42 = vmatpush1.xpose.msra.mxu0 0.0
    %43 = vmatprep.subr.mxu0 0.0
    %44 = vmatpush1.xpose.msra.mxu0 0.0
    %45 = vmatprep.subr.mxu0 0.0
    %46 = vmatpush1.xpose.msra.mxu0 0.0
    %47 = vmatprep.subr.mxu0 0.0
    %48 = vmatpush1.xpose.msra.mxu0 0.0
    %49 = vmatprep.subr.mxu0 0.0
    %50 = vmatpush1.xpose.msra.mxu0 0.0
    %51 = vmatprep.subr.mxu0 0.0
    %52 = vmatpush1.xpose.msra.mxu0 0.0
    %53 = vmatprep.subr.mxu0 0.0
    %54 = vmatpush1.xpose.msra.mxu0 0.0
    %55 = vmatprep.subr.mxu0 0.0
    %56 = vmatpush1.xpose.msra.mxu0 0.0
    %57 = vmatprep.subr.mxu0 0.0
    %58 = vmatpush1.xpose.msra.mxu0 0.0
    %59 = vmatprep.subr.mxu0 0.0
    %60 = vmatpush1.xpose.msra.mxu0 0.0
    %61 = vmatprep.subr.mxu0 0.0
    %62 = vmatpush1.xpose.msra.mxu0 0.0
    %63 = vmatprep.subr.mxu0 0.0
    %64 = vmatpush1.xpose.msra.mxu0 0.0
    %65 = vmatprep.subr.mxu0 0.0
    %66 = vmatpush1.xpose.msra.mxu0 0.0
    %67 = vmatprep.subr.mxu0 0.0
    %68 = vmatpush1.xpose.msra.mxu0 0.0
    %69 = vmatprep.subr.mxu0 0.0
    %70 = vmatpush1.xpose.msra.mxu0 0.0
    %71 = vmatprep.subr.mxu0 0.0
    %72 = vmatpush1.xpose.msra.mxu0 0.0
    %73 = vmatprep.subr.mxu0 0.0
    %74 = vmatpush1.xpose.msra.mxu0 0.0
    %75 = vmatprep.subr.mxu0 0.0
    %76 = vmatpush1.xpose.msra.mxu0 0.0
    %77 = vmatprep.subr.mxu0 0.0
    %78 = vmatpush1.xpose.msra.mxu0 0.0
    %79 = vmatprep.subr.mxu0 0.0
    %80 = vmatpush1.xpose.msra.mxu0 0.0
    %81 = vmatprep.subr.mxu0 0.0
    %82 = vmatpush1.xpose.msra.mxu0 0.0
    %83 = vmatprep.subr.mxu0 0.0
    %84 = vmatpush1.xpose.msra.mxu0 0.0
    %85 = vmatprep.subr.mxu0 0.0
    %86 = vmatpush1.xpose.msra.mxu0 0.0
    %87 = vmatprep.subr.mxu0 0.0
    %88 = vmatpush1.xpose.msra.mxu0 0.0
    %89 = vmatprep.subr.mxu0 0.0
    %90 = vmatpush1.xpose.msra.mxu0 0.0
    %91 = vmatprep.subr.mxu0 0.0
    %92 = vmatpush1.xpose.msra.mxu0 0.0
    %93 = vmatprep.subr.mxu0 0.0
    %94 = vmatpush1.xpose.msra.mxu0 0.0
    %95 = vmatprep.subr.mxu0 0.0
    %96 = vmatpush1.xpose.msra.mxu0 0.0
    %97 = vmatprep.mubr.f32.mxu0 0.0
    %98 = vmatmul.mubr.f32.gmra.mrb[0].mxu0 %v22
    %v99 = vpop.f32.mrb[0].mxu0
    %v100 = vadd.f32 0.0, %v99
    %v101 = vpop.f32.mrb[0].mxu0
    %102 = vmatprep.mubr.f32.mxu0 0.0
    %103 = vmatmul.mubr.f32.gmra.mrb[0].mxu0 %v25
    %v104 = vpop.f32.mrb[0].mxu0
    %v105 = vadd.f32 0.0, %v104
    %v106 = vpop.f32.mrb[0].mxu0
    %107 = vdwg.mxu0
    %v109 = vsel %vm20, %v14, 0
    %v112 = vsel %vm20, %v15, 0
    %v115 = vsel %vm20, %v18, 0
    %v118 = vsel %vm20, %v19, 0
    %120 = vmatprep.subr.mxu0 0.0
    %121 = vmatpush1.xpose.msra.mxu0 %v115
    %122 = vmatprep.subr.mxu0 0.0
    %123 = vmatpush1.xpose.msra.mxu0 %v118
    %124 = vmatprep.subr.mxu0 0.0
    %125 = vmatpush1.xpose.msra.mxu0 0.0
    %126 = vmatprep.subr.mxu0 0.0
    %127 = vmatpush1.xpose.msra.mxu0 0.0
    %128 = vmatprep.subr.mxu0 0.0
    %129 = vmatpush1.xpose.msra.mxu0 0.0
    %130 = vmatprep.subr.mxu0 0.0
    %131 = vmatpush1.xpose.msra.mxu0 0.0
    %132 = vmatprep.subr.mxu0 0.0
    %133 = vmatpush1.xpose.msra.mxu0 0.0
    %134 = vmatprep.subr.mxu0 0.0
    %135 = vmatpush1.xpose.msra.mxu0 0.0
    %136 = vmatprep.subr.mxu0 0.0
    %137 = vmatpush1.xpose.msra.mxu0 0.0
    %138 = vmatprep.subr.mxu0 0.0
    %139 = vmatpush1.xpose.msra.mxu0 0.0
    %140 = vmatprep.subr.mxu0 0.0
    %141 = vmatpush1.xpose.msra.mxu0 0.0
    %142 = vmatprep.subr.mxu0 0.0
    %143 = vmatpush1.xpose.msra.mxu0 0.0
    %144 = vmatprep.subr.mxu0 0.0
    %145 = vmatpush1.xpose.msra.mxu0 0.0
    %146 = vmatprep.subr.mxu0 0.0
    %147 = vmatpush1.xpose.msra.mxu0 0.0
    %148 = vmatprep.subr.mxu0 0.0
    %149 = vmatpush1.xpose.msra.mxu0 0.0
    %150 = vmatprep.subr.mxu0 0.0
    %151 = vmatpush1.xpose.msra.mxu0 0.0
    %152 = vmatprep.subr.mxu0 0.0
    %153 = vmatpush1.xpose.msra.mxu0 0.0
    %154 = vmatprep.subr.mxu0 0.0
    %155 = vmatpush1.xpose.msra.mxu0 0.0
    %156 = vmatprep.subr.mxu0 0.0
    %157 = vmatpush1.xpose.msra.mxu0 0.0
    %158 = vmatprep.subr.mxu0 0.0
    %159 = vmatpush1.xpose.msra.mxu0 0.0
    %160 = vmatprep.subr.mxu0 0.0
    %161 = vmatpush1.xpose.msra.mxu0 0.0
    %162 = vmatprep.subr.mxu0 0.0
    %163 = vmatpush1.xpose.msra.mxu0 0.0
    %164 = vmatprep.subr.mxu0 0.0
    %165 = vmatpush1.xpose.msra.mxu0 0.0
    %166 = vmatprep.subr.mxu0 0.0
    %167 = vmatpush1.xpose.msra.mxu0 0.0
    %168 = vmatprep.subr.mxu0 0.0
    %169 = vmatpush1.xpose.msra.mxu0 0.0
    %170 = vmatprep.subr.mxu0 0.0
    %171 = vmatpush1.xpose.msra.mxu0 0.0
    %172 = vmatprep.subr.mxu0 0.0
    %173 = vmatpush1.xpose.msra.mxu0 0.0
    %174 = vmatprep.subr.mxu0 0.0
    %175 = vmatpush1.xpose.msra.mxu0 0.0
    %176 = vmatprep.subr.mxu0 0.0
    %177 = vmatpush1.xpose.msra.mxu0 0.0
    %178 = vmatprep.subr.mxu0 0.0
    %179 = vmatpush1.xpose.msra.mxu0 0.0
    %180 = vmatprep.subr.mxu0 0.0
    %181 = vmatpush1.xpose.msra.mxu0 0.0
    %182 = vmatprep.subr.mxu0 0.0
    %183 = vmatpush1.xpose.msra.mxu0 0.0
    %184 = vmatprep.mubr.f32.mxu0 0.0
    %185 = vmatmul.mubr.f32.gmra.mrb[0].mxu0 %v109
    %v186 = vpop.f32.mrb[0].mxu0
    %v187 = vadd.f32 0.0, %v186
    %v188 = vpop.f32.mrb[0].mxu0
    %189 = vmatprep.mubr.f32.mxu0 0.0
    %190 = vmatmul.mubr.f32.gmra.mrb[0].mxu0 %v112
    %v191 = vpop.f32.mrb[0].mxu0
    %v192 = vadd.f32 0.0, %v191
    %v193 = vpop.f32.mrb[0].mxu0
    %194 = vdwg.mxu0
    %v195 = vmax.f32 %v100, 0.0
    %v196 = vmax.f32 %v105, 0.0
    %v197 = vmax.f32 %v187, 0.0
    %v198 = vmax.f32 %v192, 0.0
    %vm199 = vcmask 130048
    %200 = vst.msk [vmem:[#allocation2] sm:$0xff] %vm199, %v195
    %201 = vst.msk [vmem:[#allocation2 + $0x8] sm:$0xff] %vm199, %v196
    %202 = vst.msk [vmem:[#allocation2 + $0x10] sm:$0xff] %vm199, %v197
    %203 = vst.msk [vmem:[#allocation2 + $0x18] sm:$0xff] %vm199, %v198
    // Predicated region
    $region10: #{gnn_forward.3} parent=1 // pred_check
      _
    $region11: #{gnn_forward.3} parent=1 // pred_check_branch
      %205 = sbr.rel (0) target = $region13
    $region12: #{gnn_forward.3} parent=1 // pred_region
      %s207 = ssub.s32 512, 512
      %208 = vsyncadd [#allocation3], %s207
      %s209 = sshll.u32 [#allocation2], 4
      %s210 = int_to_ptr.vmem [resolvable:$true] %s209
      %215 = dma.vmem_to_hbm [thread:$0]  %s210, 512, %s2, [#allocation3], 128, 128, 8
    $region13: #{gnn_forward.3} parent=1 // pred_fallthru
      _
    // Predicated region
    $region14: #{gnn_forward.3} parent=1 // pred_check
      _
    $region15: #{gnn_forward.3} parent=1 // pred_check_branch
      %217 = sbr.rel (0) target = $region17
    $region16: #{gnn_forward.3} parent=1 // pred_region
      %218 = dma.done [#allocation3], 512
    $region17: #{gnn_forward.3} parent=1 // pred_fallthru
      _
    %219 = vsyncpa [#allocation3], 1

</llo_original>
